<compile_context>
chip_gen: v7x
topology: tpu7x:2x2x1
jax: 0.10.0
libtpu: 0.0.40
codegen_flags: <defaults>
</compile_context>

<pallas_src>
import jax
import jax.numpy as jnp
from jax.experimental import pallas as pl
from jax.experimental.pallas import tpu as pltpu

HIDDEN = 100          # logical hidden size (matches the PyTorch module)
HP = 128              # padded hidden per head (lane-native)
HF = 2 * HP           # fused hidden (both heads)
OUT_PAD = 128         # lane-dense output width (only cols 0,1 are real)


def _round_up(x, m):
    return (x + m - 1) // m * m


def _param_layout(input_dim, output_dim):
    r_w1a = _round_up(input_dim, 8)
    r_w2 = r_w1a + _round_up(output_dim, 8)
    r_w3 = r_w2 + HF
    r_b1 = r_w3 + HF
    r_b2 = r_b1 + 8
    r_b3 = r_b2 + 8
    r_tot = r_b3 + 8
    return r_w1a, r_w2, r_w3, r_b1, r_b2, r_b3, r_tot


def pack_params(params, input_dim, output_dim, hidden=HIDDEN):
    """Pack the 12 per-layer tensors into one (rows, 256) f32 array."""
    (w1a, b1a, w2a, b2a, w3a, b3a,
     w1b, b1b, w2b, b2b, w3b, b3b) = params
    d_s, d_a = input_dim, output_dim
    r_w1a, r_w2, r_w3, r_b1, r_b2, r_b3, r_tot = _param_layout(d_s, d_a)

    P = jnp.zeros((r_tot, HF), dtype=jnp.float32)
    # Layer 1: split into state / action row bands; head A -> cols 0:H, head B -> cols HP:HP+H.
    P = P.at[0:d_s, 0:hidden].set(w1a[:d_s])
    P = P.at[0:d_s, HP:HP + hidden].set(w1b[:d_s])
    P = P.at[r_w1a:r_w1a + d_a, 0:hidden].set(w1a[d_s:])
    P = P.at[r_w1a:r_w1a + d_a, HP:HP + hidden].set(w1b[d_s:])
    # Layer 2: block-diagonal fused weight (off-diagonal and padded rows/cols stay 0).
    P = P.at[r_w2:r_w2 + hidden, 0:hidden].set(w2a)
    P = P.at[r_w2 + HP:r_w2 + HP + hidden, HP:HP + hidden].set(w2b)
    # Layer 3: q1 -> output col 0, q2 -> output col 1.
    P = P.at[r_w3:r_w3 + hidden, 0:1].set(w3a)
    P = P.at[r_w3 + HP:r_w3 + HP + hidden, 1:2].set(w3b)
    # Biases (padded entries stay exactly 0 so ReLU(0)=0 keeps padding inert).
    P = P.at[r_b1, 0:hidden].set(b1a[0])
    P = P.at[r_b1, HP:HP + hidden].set(b1b[0])
    P = P.at[r_b2, 0:hidden].set(b2a[0])
    P = P.at[r_b2, HP:HP + hidden].set(b2b[0])
    P = P.at[r_b3, 0].set(b3a[0, 0])
    P = P.at[r_b3, 1].set(b3b[0, 0])
    return P, (d_s, d_a, r_w1a, r_w2, r_w3, r_b1, r_b2, r_b3)


def _make_kernel(d_s, d_a, r_w1a, r_w2, r_w3, r_b1, r_b2, r_b3):
    def kernel(state_ref, action_ref, p_ref, out_ref):
        s = state_ref[...]                                  # (TB, d_s)
        a = action_ref[...]                                 # (TB, d_a)
        w1s = p_ref[0:d_s, :]                               # (d_s, 256)
        w1a = p_ref[r_w1a:r_w1a + d_a, :]                   # (d_a, 256)
        w2 = p_ref[r_w2:r_w2 + HF, :]                       # (256, 256) block-diag
        w3 = p_ref[r_w3:r_w3 + HF, 0:OUT_PAD]               # (256, 128)
        b1 = p_ref[r_b1:r_b1 + 1, :]                        # (1, 256)
        b2 = p_ref[r_b2:r_b2 + 1, :]                        # (1, 256)
        b3 = p_ref[r_b3:r_b3 + 1, 0:OUT_PAD]                # (1, 128)

        # Layer 1 (concat-free): h = state@W1_s + action@W1_a + b1, both heads at once.
        h = jnp.dot(s, w1s, preferred_element_type=jnp.float32)
        h = h + jnp.dot(a, w1a, preferred_element_type=jnp.float32)
        h = jnp.maximum(h + b1, 0.0)
        # Layer 2 (block-diagonal fused).
        h = jnp.maximum(jnp.dot(h, w2, preferred_element_type=jnp.float32) + b2, 0.0)
        # Layer 3: lane-dense output, q1 in col 0, q2 in col 1.
        out_ref[...] = jnp.dot(h, w3, preferred_element_type=jnp.float32) + b3

    return kernel


def qnetwork_forward(state, action, packed_params, layout):
    """state: (B, input_dim), action: (B, output_dim) -> (q1, q2), each (B, 1)."""
    d_s, d_a, r_w1a, r_w2, r_w3, r_b1, r_b2, r_b3 = layout
    B = state.shape[0]

    # Batch tiling: single resident block for small B, 256-row tiles (parallel
    # across TensorCores) for large B.
    if B <= 256:
        TB = max(8, _round_up(B, 8))
    else:
        TB = 256
    B_pad = _round_up(B, TB)
    if B_pad != B:
        state = jnp.pad(state, ((0, B_pad - B), (0, 0)))
        action = jnp.pad(action, ((0, B_pad - B), (0, 0)))
    nb = B_pad // TB
    r_tot = packed_params.shape[0]

    kernel = _make_kernel(d_s, d_a, r_w1a, r_w2, r_w3, r_b1, r_b2, r_b3)

    out = pl.pallas_call(
        kernel,
        out_shape=jax.ShapeDtypeStruct((B_pad, OUT_PAD), jnp.float32),
        grid=(nb,),
        in_specs=[
            pl.BlockSpec((TB, d_s), lambda i: (i, 0)),
            pl.BlockSpec((TB, d_a), lambda i: (i, 0)),
            pl.BlockSpec((r_tot, HF), lambda i: (0, 0)),   # weights stay resident
        ],
        out_specs=pl.BlockSpec((TB, OUT_PAD), lambda i: (i, 0)),
        compiler_params=pltpu.CompilerParams(dimension_semantics=("parallel",)),
    )(state, action, packed_params)

    return out[:B, 0:1], out[:B, 1:2]


def init_params(key, qnet_input_size, hidden=HIDDEN):
    """Xavier-normal weights, zero biases, for both Q heads (12 tensors, (in,out) layout)."""
    def xavier(k, fan_in, fan_out):
        std = (2.0 / (fan_in + fan_out)) ** 0.5
        return std * jax.random.normal(k, (fan_in, fan_out), dtype=jnp.float32)

    keys = jax.random.split(key, 6)
    dims = [(qnet_input_size, hidden), (hidden, hidden), (hidden, 1)]
    params = []
    for head in range(2):
        for li, (fi, fo) in enumerate(dims):
            k = keys[head * 3 + li]
            params.append(xavier(k, fi, fo))
            params.append(jnp.zeros((1, fo), dtype=jnp.float32))
    return tuple(params)


def _reference(state, action, params):
    """Plain-JAX reference of the original (unfused) forward."""
    x = jnp.concatenate([state, action], axis=1)
    (w1a, b1a, w2a, b2a, w3a, b3a,
     w1b, b1b, w2b, b2b, w3b, b3b) = params

    def mlp(w1, b1, w2, b2, w3, b3):
        h = jnp.maximum(x @ w1 + b1, 0.0)
        h = jnp.maximum(h @ w2 + b2, 0.0)
        return h @ w3 + b3

    return mlp(w1a, b1a, w2a, b2a, w3a, b3a), mlp(w1b, b1b, w2b, b2b, w3b, b3b)


if __name__ == "__main__":
    # config.input_dim = 16, config.output_dim = 4  ->  qnet_input_size = 20
    B, INPUT_DIM, OUTPUT_DIM = 2, 16, 4
    qnet_input_size = INPUT_DIM + OUTPUT_DIM

    key = jax.random.PRNGKey(0)
    k_state, k_action, k_params = jax.random.split(key, 3)

    state = jax.random.normal(k_state, (B, INPUT_DIM), dtype=jnp.float32)
    action = jax.random.normal(k_action, (B, OUTPUT_DIM), dtype=jnp.float32)
    params = init_params(k_params, qnet_input_size)

    packed, layout = pack_params(params, INPUT_DIM, OUTPUT_DIM)

    q1, q2 = qnetwork_forward(state, action, packed, layout)
    q1 = jax.block_until_ready(q1)
    q2 = jax.block_until_ready(q2)

    r1, r2 = _reference(state, action, params)
    assert q1.shape == (B, 1) and q2.shape == (B, 1)
    assert jnp.allclose(q1, r1, atol=1e-4, rtol=1e-4)
    assert jnp.allclose(q2, r2, atol=1e-4, rtol=1e-4)

    # TODO(synk): optional bf16 weight storage for v6e/v7x (f32 kept here so the
    # strict numerical check against the f32 reference holds on all chips).
    print("KERNEL_OK")
</pallas_src>

<mosaic_0001>
module attributes {stable_mosaic.version = 11 : i64} {
  func.func @kernel(%arg0: i32, %arg1: memref<8x16xf32, #tpu.memory_space<vmem>>, %arg2: memref<8x4xf32, #tpu.memory_space<vmem>>, %arg3: memref<560x256xf32, #tpu.memory_space<vmem>>, %arg4: memref<8x128xf32, #tpu.memory_space<vmem>>) attributes {dimension_semantics = [#tpu.dimension_semantics<parallel>], iteration_bounds = array<i64: 1>, scalar_prefetch = 0 : i64, scratch_operands = 0 : i64, tpu.core_type = #tpu.core_type<tc>, window_params = [{transform_indices = @transform_0, window_bounds = array<i64: 8, 16>}, {transform_indices = @transform_1, window_bounds = array<i64: 8, 4>}, {pipeline_mode = #tpu.pipeline_mode<synchronous>, transform_indices = @transform_2, window_bounds = array<i64: 560, 256>}, {transform_indices = @transform_3, window_bounds = array<i64: 8, 128>}]} {
    %c0 = arith.constant 0 : index
    %c0_0 = arith.constant 0 : index
    %0 = vector.load %arg1[%c0, %c0_0] : memref<8x16xf32, #tpu.memory_space<vmem>>, vector<8x16xf32>
    %c0_1 = arith.constant 0 : index
    %c0_2 = arith.constant 0 : index
    %1 = vector.load %arg2[%c0_1, %c0_2] : memref<8x4xf32, #tpu.memory_space<vmem>>, vector<8x4xf32>
    %c0_3 = arith.constant 0 : index
    %c0_4 = arith.constant 0 : index
    %2 = vector.load %arg3[%c0_3, %c0_4] : memref<560x256xf32, #tpu.memory_space<vmem>>, vector<16x256xf32>
    %c16 = arith.constant 16 : index
    %c0_5 = arith.constant 0 : index
    %3 = vector.load %arg3[%c16, %c0_5] : memref<560x256xf32, #tpu.memory_space<vmem>>, vector<4x256xf32>
    %c24 = arith.constant 24 : index
    %c0_6 = arith.constant 0 : index
    %4 = vector.load %arg3[%c24, %c0_6] : memref<560x256xf32, #tpu.memory_space<vmem>>, vector<256x256xf32>
    %c280 = arith.constant 280 : index
    %c0_7 = arith.constant 0 : index
    %5 = vector.load %arg3[%c280, %c0_7] : memref<560x256xf32, #tpu.memory_space<vmem>>, vector<256x128xf32>
    %c536 = arith.constant 536 : index
    %c0_8 = arith.constant 0 : index
    %6 = vector.load %arg3[%c536, %c0_8] : memref<560x256xf32, #tpu.memory_space<vmem>>, vector<1x256xf32>
    %c544 = arith.constant 544 : index
    %c0_9 = arith.constant 0 : index
    %7 = vector.load %arg3[%c544, %c0_9] : memref<560x256xf32, #tpu.memory_space<vmem>>, vector<1x256xf32>
    %c552 = arith.constant 552 : index
    %c0_10 = arith.constant 0 : index
    %8 = vector.load %arg3[%c552, %c0_10] : memref<560x256xf32, #tpu.memory_space<vmem>>, vector<1x128xf32>
    %cst = arith.constant dense<0.000000e+00> : vector<8x256xf32>
    %9 = tpu.matmul %0, %2, %cst {dimension_numbers = #tpu.dot_dimension_numbers<[1], [0], [0], [1], [0, 0, 1, 1], [], []>} : vector<8x16xf32>, vector<16x256xf32>, vector<8x256xf32> -> vector<8x256xf32>
    %cst_11 = arith.constant dense<0.000000e+00> : vector<8x256xf32>
    %10 = tpu.matmul %1, %3, %cst_11 {dimension_numbers = #tpu.dot_dimension_numbers<[1], [0], [0], [1], [0, 0, 1, 1], [], []>} : vector<8x4xf32>, vector<4x256xf32>, vector<8x256xf32> -> vector<8x256xf32>
    %11 = arith.addf %9, %10 : vector<8x256xf32>
    %12 = vector.broadcast %6 : vector<1x256xf32> to vector<8x256xf32>
    %13 = arith.addf %11, %12 : vector<8x256xf32>
    %cst_12 = arith.constant 0.000000e+00 : f32
    %14 = vector.broadcast %cst_12 : f32 to vector<8x256xf32>
    %15 = arith.maximumf %13, %14 : vector<8x256xf32>
    %cst_13 = arith.constant dense<0.000000e+00> : vector<8x256xf32>
    %16 = tpu.matmul %15, %4, %cst_13 {dimension_numbers = #tpu.dot_dimension_numbers<[1], [0], [0], [1], [0, 0, 1, 1], [], []>} : vector<8x256xf32>, vector<256x256xf32>, vector<8x256xf32> -> vector<8x256xf32>
    %17 = vector.broadcast %7 : vector<1x256xf32> to vector<8x256xf32>
    %18 = arith.addf %16, %17 : vector<8x256xf32>
    %cst_14 = arith.constant 0.000000e+00 : f32
    %19 = vector.broadcast %cst_14 : f32 to vector<8x256xf32>
    %20 = arith.maximumf %18, %19 : vector<8x256xf32>
    %cst_15 = arith.constant dense<0.000000e+00> : vector<8x128xf32>
    %21 = tpu.matmul %20, %5, %cst_15 {dimension_numbers = #tpu.dot_dimension_numbers<[1], [0], [0], [1], [0, 0, 1, 1], [], []>} : vector<8x256xf32>, vector<256x128xf32>, vector<8x128xf32> -> vector<8x128xf32>
    %22 = vector.broadcast %8 : vector<1x128xf32> to vector<8x128xf32>
    %23 = arith.addf %21, %22 : vector<8x128xf32>
    %c0_16 = arith.constant 0 : index
    %c0_17 = arith.constant 0 : index
    %24 = vector.load %arg4[%c0_16, %c0_17] : memref<8x128xf32, #tpu.memory_space<vmem>>, vector<8x128xf32>
    tpu.vector_store %arg4[%c0_16, %c0_17], %23 {strides = array<i32>} : memref<8x128xf32, #tpu.memory_space<vmem>>, vector<8x128xf32>,
    return
  }
  func.func @transform_0(%arg0: i32) -> (i32, i32) {
    %c0_i32 = arith.constant 0 : i32
    %c0_i32_0 = arith.constant 0 : i32
    return %arg0, %c0_i32 : i32, i32
  }
  func.func @transform_1(%arg0: i32) -> (i32, i32) {
    %c0_i32 = arith.constant 0 : i32
    %c0_i32_0 = arith.constant 0 : i32
    return %arg0, %c0_i32 : i32, i32
  }
  func.func @transform_2(%arg0: i32) -> (i32, i32) {
    %c0_i32 = arith.constant 0 : i32
    %c0_i32_0 = arith.constant 0 : i32
    %c0_i32_1 = arith.constant 0 : i32
    return %c0_i32, %c0_i32_0 : i32, i32
  }
  func.func @transform_3(%arg0: i32) -> (i32, i32) {
    %c0_i32 = arith.constant 0 : i32
    %c0_i32_0 = arith.constant 0 : i32
    return %arg0, %c0_i32 : i32, i32
  }
}

</mosaic_0001>

<llo_original>
// kernel: tpu_custom_call.1
$region0: #{tpu_custom_call.1}
  #allocation0 [shape = 'u32[]', space=smem, size = 0x4, offset = 0x4, fixed_abs, tag = 'smem constant byte address 0x4 - core index']
  #allocation1 [shape = 'u32[144,128]{1,0:T(1,128)}', space=vmem, size = 0x12000, scoped, tag = 'internal scratch']
  %s0 = inlined_call_operand.vmem [shape: f32[8,16], index: 0, kind: input, shape index: {}]
  %s1 = inlined_call_operand.vmem [shape: f32[8,4], index: 1, kind: input, shape index: {}]
  %s2 = inlined_call_operand.hbm [shape: f32[560,256], index: 2, kind: input, shape index: {}]
  %s3 = inlined_call_operand.hbm [shape: f32[8,128], index: 3, kind: output, shape index: {}]
  %s4 = sld [smem:[#allocation0]]
  $region26: #{tpu_custom_call.1} parent=0
    _
  %s6 = ssub.s32 1, %s4
  %s7 = scalar_select 0, %s6, %s4
  $region1: #{tpu_custom_call.1} parent=0
    #allocation2 [shape = 'u8[573440]{0}', space=vmem, size = 0x8c000, scoped, tag = 'input window, operand 2, single buffered']
    #allocation3 [shape = 's32[1]{0}', space=sflag, size = 0x4, scoped, tag = 'scoped memory for tpu_custom_call.1']
    #allocation4 [shape = 's32[1]{0}', space=sflag, size = 0x4, scoped, tag = 'scoped memory for tpu_custom_call.1']
    #allocation5 [shape = 'u8[4096]{0}', space=vmem, size = 0x1000, scoped, tag = 'output window, operand 0, single buffered']
    %8 = vsyncpa [#allocation3], 0
    %9 = vsyncpa [#allocation4], 0
    // Predicated region
    $region2: #{tpu_custom_call.1} parent=1 // pred_check
      _
    $region3: #{tpu_custom_call.1} parent=1 // pred_check_branch
      %11 = sbr.rel (0) target = $region5
    $region4: #{tpu_custom_call.1} parent=1 // pred_region
      _
    $region5: #{tpu_custom_call.1} parent=1 // pred_fallthru
      _
    // Predicated region
    $region6: #{tpu_custom_call.1} parent=1 // pred_check
      _
    $region7: #{tpu_custom_call.1} parent=1 // pred_check_branch
      %13 = sbr.rel (0) target = $region9
    $region8: #{tpu_custom_call.1} parent=1 // pred_region
      _
    $region9: #{tpu_custom_call.1} parent=1 // pred_fallthru
      _
    // Predicated region
    $region10: #{tpu_custom_call.1} parent=1 // pred_check
      _
    $region11: #{tpu_custom_call.1} parent=1 // pred_check_branch
      %15 = sbr.rel (0) target = $region13
    $region12: #{tpu_custom_call.1} parent=1 // pred_region
      %s17 = ssub.s32 17920, 17920
      %18 = vsyncadd [#allocation3], %s17
      %s19 = sshll.u32 [#allocation2], 4
      %s20 = int_to_ptr.vmem [resolvable:$true] %s19
      %25 = dma.hbm_to_vmem [thread:$0]  %s2, 17920, %s20, [#allocation3], 256, 256, 16
    $region13: #{tpu_custom_call.1} parent=1 // pred_fallthru
      _
    // Predicated region
    $region14: #{tpu_custom_call.1} parent=1 // pred_check
      _
    $region15: #{tpu_custom_call.1} parent=1 // pred_check_branch
      %27 = sbr.rel (0) target = $region17
    $region16: #{tpu_custom_call.1} parent=1 // pred_region
      %28 = dma.done [#allocation3], 17920
    $region17: #{tpu_custom_call.1} parent=1 // pred_fallthru
      _
    %v29 = vld [vmem:[%s0] sm:$0xff]
    %v30 = vld [vmem:[%s1] sm:$0xff]
    %v31 = vld [vmem:[#allocation2] sm:$0xff]
    %v32 = vld [vmem:[#allocation2 + $0x8] sm:$0xff]
    %v33 = vld [vmem:[#allocation2 + $0x10] sm:$0xff]
    %v34 = vld [vmem:[#allocation2 + $0x18] sm:$0xff]
    %v35 = vld [vmem:[#allocation2 + $0x20] sm:$0xf]
    %v36 = vld [vmem:[#allocation2 + $0x28] sm:$0xf]
    %v37 = vld [vmem:[#allocation2 + $0x30] sm:$0xff]
    %v38 = vld [vmem:[#allocation2 + $0x38] sm:$0xff]
    %v39 = vld [vmem:[#allocation2 + $0x40] sm:$0xff]
    %v40 = vld [vmem:[#allocation2 + $0x48] sm:$0xff]
    %v41 = vld [vmem:[#allocation2 + $0x50] sm:$0xff]
    %v42 = vld [vmem:[#allocation2 + $0x58] sm:$0xff]
    %v43 = vld [vmem:[#allocation2 + $0x60] sm:$0xff]
    %v44 = vld [vmem:[#allocation2 + $0x68] sm:$0xff]
    %v45 = vld [vmem:[#allocation2 + $0x70] sm:$0xff]
    %v46 = vld [vmem:[#allocation2 + $0x78] sm:$0xff]
    %v47 = vld [vmem:[#allocation2 + $0x80] sm:$0xff]
    %v48 = vld [vmem:[#allocation2 + $0x88] sm:$0xff]
    %v49 = vld [vmem:[#allocation2 + $0x90] sm:$0xff]
    %v50 = vld [vmem:[#allocation2 + $0x98] sm:$0xff]
    %v51 = vld [vmem:[#allocation2 + $0xa0] sm:$0xff]
    %v52 = vld [vmem:[#allocation2 + $0xa8] sm:$0xff]
    %v53 = vld [vmem:[#allocation2 + $0xb0] sm:$0xff]
    %v54 = vld [vmem:[#allocation2 + $0xb8] sm:$0xff]
    %v55 = vld [vmem:[#allocation2 + $0xc0] sm:$0xff]
    %v56 = vld [vmem:[#allocation2 + $0xc8] sm:$0xff]
    %v57 = vld [vmem:[#allocation2 + $0xd0] sm:$0xff]
    %v58 = vld [vmem:[#allocation2 + $0xd8] sm:$0xff]
    %v59 = vld [vmem:[#allocation2 + $0xe0] sm:$0xff]
    %v60 = vld [vmem:[#allocation2 + $0xe8] sm:$0xff]
    %v61 = vld [vmem:[#allocation2 + $0xf0] sm:$0xff]
    %v62 = vld [vmem:[#allocation2 + $0xf8] sm:$0xff]
    %v63 = vld [vmem:[#allocation2 + $0x100] sm:$0xff]
    %v64 = vld [vmem:[#allocation2 + $0x108] sm:$0xff]
    %v65 = vld [vmem:[#allocation2 + $0x110] sm:$0xff]
    %v66 = vld [vmem:[#allocation2 + $0x118] sm:$0xff]
    %v67 = vld [vmem:[#allocation2 + $0x120] sm:$0xff]
    %v68 = vld [vmem:[#allocation2 + $0x128] sm:$0xff]
    %v69 = vld [vmem:[#allocation2 + $0x130] sm:$0xff]
    %v70 = vld [vmem:[#allocation2 + $0x138] sm:$0xff]
    %v71 = vld [vmem:[#allocation2 + $0x140] sm:$0xff]
    %v72 = vld [vmem:[#allocation2 + $0x148] sm:$0xff]
    %v73 = vld [vmem:[#allocation2 + $0x150] sm:$0xff]
    %v74 = vld [vmem:[#allocation2 + $0x158] sm:$0xff]
    %v75 = vld [vmem:[#allocation2 + $0x160] sm:$0xff]
    %v76 = vld [vmem:[#allocation2 + $0x168] sm:$0xff]
    %v77 = vld [vmem:[#allocation2 + $0x170] sm:$0xff]
    %v78 = vld [vmem:[#allocation2 + $0x178] sm:$0xff]
    %v79 = vld [vmem:[#allocation2 + $0x180] sm:$0xff]
    %v80 = vld [vmem:[#allocation2 + $0x188] sm:$0xff]
    %v81 = vld [vmem:[#allocation2 + $0x190] sm:$0xff]
    %v82 = vld [vmem:[#allocation2 + $0x198] sm:$0xff]
    %v83 = vld [vmem:[#allocation2 + $0x1a0] sm:$0xff]
    %v84 = vld [vmem:[#allocation2 + $0x1a8] sm:$0xff]
    %v85 = vld [vmem:[#allocation2 + $0x1b0] sm:$0xff]
    %v86 = vld [vmem:[#allocation2 + $0x1b8] sm:$0xff]
    %v87 = vld [vmem:[#allocation2 + $0x1c0] sm:$0xff]
    %v88 = vld [vmem:[#allocation2 + $0x1c8] sm:$0xff]
    %v89 = vld [vmem:[#allocation2 + $0x1d0] sm:$0xff]
    %v90 = vld [vmem:[#allocation2 + $0x1d8] sm:$0xff]
    %v91 = vld [vmem:[#allocation2 + $0x1e0] sm:$0xff]
    %v92 = vld [vmem:[#allocation2 + $0x1e8] sm:$0xff]
    %v93 = vld [vmem:[#allocation2 + $0x1f0] sm:$0xff]
    %v94 = vld [vmem:[#allocation2 + $0x1f8] sm:$0xff]
    %v95 = vld [vmem:[#allocation2 + $0x200] sm:$0xff]
    %v96 = vld [vmem:[#allocation2 + $0x208] sm:$0xff]
    %v97 = vld [vmem:[#allocation2 + $0x210] sm:$0xff]
    %v98 = vld [vmem:[#allocation2 + $0x218] sm:$0xff]
    %v99 = vld [vmem:[#allocation2 + $0x220] sm:$0xff]
    %v100 = vld [vmem:[#allocation2 + $0x228] sm:$0xff]
    %v101 = vld [vmem:[#allocation2 + $0x230] sm:$0xff]
    %v102 = vld [vmem:[#allocation2 + $0x240] sm:$0xff]
    %v103 = vld [vmem:[#allocation2 + $0x250] sm:$0xff]
    %v104 = vld [vmem:[#allocation2 + $0x260] sm:$0xff]
    %v105 = vld [vmem:[#allocation2 + $0x270] sm:$0xff]
    %v106 = vld [vmem:[#allocation2 + $0x280] sm:$0xff]
    %v107 = vld [vmem:[#allocation2 + $0x290] sm:$0xff]
    %v108 = vld [vmem:[#allocation2 + $0x2a0] sm:$0xff]
    %v109 = vld [vmem:[#allocation2 + $0x2b0] sm:$0xff]
    %v110 = vld [vmem:[#allocation2 + $0x2c0] sm:$0xff]
    %v111 = vld [vmem:[#allocation2 + $0x2d0] sm:$0xff]
    %v112 = vld [vmem:[#allocation2 + $0x2e0] sm:$0xff]
    %v113 = vld [vmem:[#allocation2 + $0x2f0] sm:$0xff]
    %v114 = vld [vmem:[#allocation2 + $0x300] sm:$0xff]
    %v115 = vld [vmem:[#allocation2 + $0x310] sm:$0xff]
    %v116 = vld [vmem:[#allocation2 + $0x320] sm:$0xff]
    %v117 = vld [vmem:[#allocation2 + $0x330] sm:$0xff]
    %v118 = vld [vmem:[#allocation2 + $0x340] sm:$0xff]
    %v119 = vld [vmem:[#allocation2 + $0x350] sm:$0xff]
    %v120 = vld [vmem:[#allocation2 + $0x360] sm:$0xff]
    %v121 = vld [vmem:[#allocation2 + $0x370] sm:$0xff]
    %v122 = vld [vmem:[#allocation2 + $0x380] sm:$0xff]
    %v123 = vld [vmem:[#allocation2 + $0x390] sm:$0xff]
    %v124 = vld [vmem:[#allocation2 + $0x3a0] sm:$0xff]
    %v125 = vld [vmem:[#allocation2 + $0x3b0] sm:$0xff]
    %v126 = vld [vmem:[#allocation2 + $0x3c0] sm:$0xff]
    %v127 = vld [vmem:[#allocation2 + $0x3d0] sm:$0xff]
    %v128 = vld [vmem:[#allocation2 + $0x3e0] sm:$0xff]
    %v129 = vld [vmem:[#allocation2 + $0x3f0] sm:$0xff]
    %v130 = vld [vmem:[#allocation2 + $0x400] sm:$0xff]
    %v131 = vld [vmem:[#allocation2 + $0x410] sm:$0xff]
    %v132 = vld [vmem:[#allocation2 + $0x420] sm:$0xff]
    %s133 = scalar_lea.vmem [#allocation2], 1072
    %v134 = vld [vmem:[%s133] ss:$8 sm:$0x3]
    %s135 = scalar_lea.vmem [#allocation2], 1088
    %v136 = vld [vmem:[%s135] ss:$8 sm:$0x3]
    %v137 = vld [vmem:[#allocation2 + $0x450] ss:$0 sm:$0xff]
    %vm138 = vcmask 31744
    %v140 = vsel %vm138, %v30, 0
    %vm142 = vcmask 1043456
    %v144 = vsel %vm142, %v35, 0
    %v147 = vsel %vm142, %v36, 0
    %149 = vmatprep.subr.mxu0 %v147
    %150 = vmatpush1.msra.mxu0 %v144
    %151 = vmatprep.subr.mxu0 0.0
    %152 = vmatpush1.msra.mxu0 0.0
    %153 = vmatprep.subr.mxu0 0.0
    %154 = vmatpush1.msra.mxu0 0.0
    %155 = vmatprep.subr.mxu0 0.0
    %156 = vmatpush1.msra.mxu0 0.0
    %157 = vmatprep.subr.mxu0 0.0
    %158 = vmatpush1.msra.mxu0 0.0
    %159 = vmatprep.subr.mxu0 0.0
    %160 = vmatpush1.msra.mxu0 0.0
    %161 = vmatprep.subr.mxu0 0.0
    %162 = vmatpush1.msra.mxu0 0.0
    %163 = vmatprep.subr.mxu0 0.0
    %164 = vmatpush1.msra.mxu0 0.0
    %165 = vmatprep.subr.mxu0 0.0
    %166 = vmatpush1.msra.mxu0 0.0
    %167 = vmatprep.subr.mxu0 0.0
    %168 = vmatpush1.msra.mxu0 0.0
    %169 = vmatprep.subr.mxu0 0.0
    %170 = vmatpush1.msra.mxu0 0.0
    %171 = vmatprep.subr.mxu0 0.0
    %172 = vmatpush1.msra.mxu0 0.0
    %173 = vmatprep.subr.mxu0 0.0
    %174 = vmatpush1.msra.mxu0 0.0
    %175 = vmatprep.subr.mxu0 0.0
    %176 = vmatpush1.msra.mxu0 0.0
    %177 = vmatprep.subr.mxu0 0.0
    %178 = vmatpush1.msra.mxu0 0.0
    %179 = vmatprep.subr.mxu0 0.0
    %180 = vmatpush1.msra.mxu0 0.0
    %181 = vmatprep.subr.mxu0 0.0
    %182 = vmatpush1.msra.mxu0 0.0
    %183 = vmatprep.subr.mxu0 0.0
    %184 = vmatpush1.msra.mxu0 0.0
    %185 = vmatprep.subr.mxu0 0.0
    %186 = vmatpush1.msra.mxu0 0.0
    %187 = vmatprep.subr.mxu0 0.0
    %188 = vmatpush1.msra.mxu0 0.0
    %189 = vmatprep.subr.mxu0 0.0
    %190 = vmatpush1.msra.mxu0 0.0
    %191 = vmatprep.subr.mxu0 0.0
    %192 = vmatpush1.msra.mxu0 0.0
    %193 = vmatprep.subr.mxu0 0.0
    %194 = vmatpush1.msra.mxu0 0.0
    %195 = vmatprep.subr.mxu0 0.0
    %196 = vmatpush1.msra.mxu0 0.0
    %197 = vmatprep.subr.mxu0 0.0
    %198 = vmatpush1.msra.mxu0 0.0
    %199 = vmatprep.subr.mxu0 0.0
    %200 = vmatpush1.msra.mxu0 0.0
    %201 = vmatprep.subr.mxu0 0.0
    %202 = vmatpush1.msra.mxu0 0.0
    %203 = vmatprep.subr.mxu0 0.0
    %204 = vmatpush1.msra.mxu0 0.0
    %205 = vmatprep.subr.mxu0 0.0
    %206 = vmatpush1.msra.mxu0 0.0
    %207 = vmatprep.subr.mxu0 0.0
    %208 = vmatpush1.msra.mxu0 0.0
    %209 = vmatprep.subr.mxu0 0.0
    %210 = vmatpush1.msra.mxu0 0.0
    %211 = vmatprep.subr.mxu0 0.0
    %212 = vmatpush1.msra.mxu0 0.0
    %213 = vmatprep.mubr.f32.mxu0 0.0
    %214 = vmatmul.mubr.f32.gmra.mrb[0].mxu0 %v140
    %v215 = vpop.f32.mrb[0].mxu0
    %v216 = vadd.f32 0.0, %v215
    %v217 = vpop.f32.mrb[0].mxu0
    %v218 = vadd.f32 0.0, %v217
    %219 = vdwg.mxu0
    %vm220 = vcmask 130048
    %v222 = vsel %vm220, %v29, 0
    %224 = vmatprep.subr.mxu0 %v32
    %225 = vmatpush1.msra.mxu0 %v31
    %226 = vmatprep.subr.mxu0 %v34
    %227 = vmatpush1.msra.mxu0 %v33
    %228 = vmatprep.subr.mxu0 0.0
    %229 = vmatpush1.msra.mxu0 0.0
    %230 = vmatprep.subr.mxu0 0.0
    %231 = vmatpush1.msra.mxu0 0.0
    %232 = vmatprep.subr.mxu0 0.0
    %233 = vmatpush1.msra.mxu0 0.0
    %234 = vmatprep.subr.mxu0 0.0
    %235 = vmatpush1.msra.mxu0 0.0
    %236 = vmatprep.subr.mxu0 0.0
    %237 = vmatpush1.msra.mxu0 0.0
    %238 = vmatprep.subr.mxu0 0.0
    %239 = vmatpush1.msra.mxu0 0.0
    %240 = vmatprep.subr.mxu0 0.0
    %241 = vmatpush1.msra.mxu0 0.0
    %242 = vmatprep.subr.mxu0 0.0
    %243 = vmatpush1.msra.mxu0 0.0
    %244 = vmatprep.subr.mxu0 0.0
    %245 = vmatpush1.msra.mxu0 0.0
    %246 = vmatprep.subr.mxu0 0.0
    %247 = vmatpush1.msra.mxu0 0.0
    %248 = vmatprep.subr.mxu0 0.0
    %249 = vmatpush1.msra.mxu0 0.0
    %250 = vmatprep.subr.mxu0 0.0
    %251 = vmatpush1.msra.mxu0 0.0
    %252 = vmatprep.subr.mxu0 0.0
    %253 = vmatpush1.msra.mxu0 0.0
    %254 = vmatprep.subr.mxu0 0.0
    %255 = vmatpush1.msra.mxu0 0.0
    %256 = vmatprep.subr.mxu0 0.0
    %257 = vmatpush1.msra.mxu0 0.0
    %258 = vmatprep.subr.mxu0 0.0
    %259 = vmatpush1.msra.mxu0 0.0
    %260 = vmatprep.subr.mxu0 0.0
    %261 = vmatpush1.msra.mxu0 0.0
    %262 = vmatprep.subr.mxu0 0.0
    %263 = vmatpush1.msra.mxu0 0.0
    %264 = vmatprep.subr.mxu0 0.0
    %265 = vmatpush1.msra.mxu0 0.0
    %266 = vmatprep.subr.mxu0 0.0
    %267 = vmatpush1.msra.mxu0 0.0
    %268 = vmatprep.subr.mxu0 0.0
    %269 = vmatpush1.msra.mxu0 0.0
    %270 = vmatprep.subr.mxu0 0.0
    %271 = vmatpush1.msra.mxu0 0.0
    %272 = vmatprep.subr.mxu0 0.0
    %273 = vmatpush1.msra.mxu0 0.0
    %274 = vmatprep.subr.mxu0 0.0
    %275 = vmatpush1.msra.mxu0 0.0
    %276 = vmatprep.subr.mxu0 0.0
    %277 = vmatpush1.msra.mxu0 0.0
    %278 = vmatprep.subr.mxu0 0.0
    %279 = vmatpush1.msra.mxu0 0.0
    %280 = vmatprep.subr.mxu0 0.0
    %281 = vmatpush1.msra.mxu0 0.0
    %282 = vmatprep.subr.mxu0 0.0
    %283 = vmatpush1.msra.mxu0 0.0
    %284 = vmatprep.subr.mxu0 0.0
    %285 = vmatpush1.msra.mxu0 0.0
    %286 = vmatprep.subr.mxu0 0.0
    %287 = vmatpush1.msra.mxu0 0.0
    %288 = vmatprep.mubr.f32.mxu0 0.0
    %289 = vmatmul.mubr.f32.gmra.mrb[0].mxu0 %v222
    %v290 = vpop.f32.mrb[0].mxu0
    %v291 = vadd.f32 %v216, %v290
    %v292 = vpop.f32.mrb[0].mxu0
    %v293 = vadd.f32 %v218, %v292
    %294 = vdwg.mxu0
    %v296 = vlaneseq
    %v297 = vshrl.u32 %v296, 7
    %v298 = vsub.s32 0, %v297
    %v299 = vrot.slane %v134, %v298
    %v300 = vlaneseq
    %v301 = vshrl.u32 %v300, 7
    %v302 = vsub.s32 1, %v301
    %v303 = vrot.slane %v134, %v302
    %v306 = vadd.f32 %v291, %v299
    %v307 = vadd.f32 %v293, %v303
    %v308 = vmax.f32 %v306, 0.0
    %v309 = vmax.f32 %v307, 0.0
    %v311 = vlaneseq
    %v312 = vshrl.u32 %v311, 7
    %v313 = vsub.s32 0, %v312
    %v314 = vrot.slane %v136, %v313
    %v315 = vlaneseq
    %v316 = vshrl.u32 %v315, 7
    %v317 = vsub.s32 1, %v316
    %v318 = vrot.slane %v136, %v317
    %321 = vmatprep.subr.mxu0 %v38
    %322 = vmatpush1.msra.mxu0 %v37
    %323 = vmatprep.subr.mxu0 %v40
    %324 = vmatpush1.msra.mxu0 %v39
    %325 = vmatprep.subr.mxu0 %v42
    %326 = vmatpush1.msra.mxu0 %v41
    %327 = vmatprep.subr.mxu0 %v44
    %328 = vmatpush1.msra.mxu0 %v43
    %329 = vmatprep.subr.mxu0 %v46
    %330 = vmatpush1.msra.mxu0 %v45
    %331 = vmatprep.subr.mxu0 %v48
    %332 = vmatpush1.msra.mxu0 %v47
    %333 = vmatprep.subr.mxu0 %v50
    %334 = vmatpush1.msra.mxu0 %v49
    %335 = vmatprep.subr.mxu0 %v52
    %336 = vmatpush1.msra.mxu0 %v51
    %337 = vmatprep.subr.mxu0 %v54
    %338 = vmatpush1.msra.mxu0 %v53
    %339 = vmatprep.subr.mxu0 %v56
    %340 = vmatpush1.msra.mxu0 %v55
    %341 = vmatprep.subr.mxu0 %v58
    %342 = vmatpush1.msra.mxu0 %v57
    %343 = vmatprep.subr.mxu0 %v60
    %344 = vmatpush1.msra.mxu0 %v59
    %345 = vmatprep.subr.mxu0 %v62
    %346 = vmatpush1.msra.mxu0 %v61
    %347 = vmatprep.subr.mxu0 %v64
    %348 = vmatpush1.msra.mxu0 %v63
    %349 = vmatprep.subr.mxu0 %v66
    %350 = vmatpush1.msra.mxu0 %v65
    %351 = vmatprep.subr.mxu0 %v68
    %352 = vmatpush1.msra.mxu0 %v67
    %353 = vmatprep.subr.mxu0 %v70
    %354 = vmatpush1.msra.mxu0 %v69
    %355 = vmatprep.subr.mxu0 %v72
    %356 = vmatpush1.msra.mxu0 %v71
    %357 = vmatprep.subr.mxu0 %v74
    %358 = vmatpush1.msra.mxu0 %v73
    %359 = vmatprep.subr.mxu0 %v76
    %360 = vmatpush1.msra.mxu0 %v75
    %361 = vmatprep.subr.mxu0 %v78
    %362 = vmatpush1.msra.mxu0 %v77
    %363 = vmatprep.subr.mxu0 %v80
    %364 = vmatpush1.msra.mxu0 %v79
    %365 = vmatprep.subr.mxu0 %v82
    %366 = vmatpush1.msra.mxu0 %v81
    %367 = vmatprep.subr.mxu0 %v84
    %368 = vmatpush1.msra.mxu0 %v83
    %369 = vmatprep.subr.mxu0 %v86
    %370 = vmatpush1.msra.mxu0 %v85
    %371 = vmatprep.subr.mxu0 %v88
    %372 = vmatpush1.msra.mxu0 %v87
    %373 = vmatprep.subr.mxu0 %v90
    %374 = vmatpush1.msra.mxu0 %v89
    %375 = vmatprep.subr.mxu0 %v92
    %376 = vmatpush1.msra.mxu0 %v91
    %377 = vmatprep.subr.mxu0 %v94
    %378 = vmatpush1.msra.mxu0 %v93
    %379 = vmatprep.subr.mxu0 %v96
    %380 = vmatpush1.msra.mxu0 %v95
    %381 = vmatprep.subr.mxu0 %v98
    %382 = vmatpush1.msra.mxu0 %v97
    %383 = vmatprep.subr.mxu0 %v100
    %384 = vmatpush1.msra.mxu0 %v99
    %385 = vmatprep.mubr.f32.mxu0 %v309
    %386 = vmatmul.mubr.f32.gmra.mrb[0].mxu0 %v308
    %v387 = vpop.f32.mrb[0].mxu0
    %v388 = vadd.f32 %v314, %v387
    %v389 = vpop.f32.mrb[0].mxu0
    %v390 = vadd.f32 %v318, %v389
    %391 = vdwg.mxu0
    %v392 = vmax.f32 %v388, 0.0
    %v393 = vmax.f32 %v390, 0.0
    %394 = vmatprep.subr.mxu0 0.0
    %395 = vmatpush1.msra.mxu0 %v101
    %396 = vmatprep.subr.mxu0 0.0
    %397 = vmatpush1.msra.mxu0 %v102
    %398 = vmatprep.subr.mxu0 0.0
    %399 = vmatpush1.msra.mxu0 %v103
    %400 = vmatprep.subr.mxu0 0.0
    %401 = vmatpush1.msra.mxu0 %v104
    %402 = vmatprep.subr.mxu0 0.0
    %403 = vmatpush1.msra.mxu0 %v105
    %404 = vmatprep.subr.mxu0 0.0
    %405 = vmatpush1.msra.mxu0 %v106
    %406 = vmatprep.subr.mxu0 0.0
    %407 = vmatpush1.msra.mxu0 %v107
    %408 = vmatprep.subr.mxu0 0.0
    %409 = vmatpush1.msra.mxu0 %v108
    %410 = vmatprep.subr.mxu0 0.0
    %411 = vmatpush1.msra.mxu0 %v109
    %412 = vmatprep.subr.mxu0 0.0
    %413 = vmatpush1.msra.mxu0 %v110
    %414 = vmatprep.subr.mxu0 0.0
    %415 = vmatpush1.msra.mxu0 %v111
    %416 = vmatprep.subr.mxu0 0.0
    %417 = vmatpush1.msra.mxu0 %v112
    %418 = vmatprep.subr.mxu0 0.0
    %419 = vmatpush1.msra.mxu0 %v113
    %420 = vmatprep.subr.mxu0 0.0
    %421 = vmatpush1.msra.mxu0 %v114
    %422 = vmatprep.subr.mxu0 0.0
    %423 = vmatpush1.msra.mxu0 %v115
    %424 = vmatprep.subr.mxu0 0.0
    %425 = vmatpush1.msra.mxu0 %v116
    %426 = vmatprep.subr.mxu0 0.0
    %427 = vmatpush1.msra.mxu0 %v117
    %428 = vmatprep.subr.mxu0 0.0
    %429 = vmatpush1.msra.mxu0 %v118
    %430 = vmatprep.subr.mxu0 0.0
    %431 = vmatpush1.msra.mxu0 %v119
    %432 = vmatprep.subr.mxu0 0.0
    %433 = vmatpush1.msra.mxu0 %v120
    %434 = vmatprep.subr.mxu0 0.0
    %435 = vmatpush1.msra.mxu0 %v121
    %436 = vmatprep.subr.mxu0 0.0
    %437 = vmatpush1.msra.mxu0 %v122
    %438 = vmatprep.subr.mxu0 0.0
    %439 = vmatpush1.msra.mxu0 %v123
    %440 = vmatprep.subr.mxu0 0.0
    %441 = vmatpush1.msra.mxu0 %v124
    %442 = vmatprep.subr.mxu0 0.0
    %443 = vmatpush1.msra.mxu0 %v125
    %444 = vmatprep.subr.mxu0 0.0
    %445 = vmatpush1.msra.mxu0 %v126
    %446 = vmatprep.subr.mxu0 0.0
    %447 = vmatpush1.msra.mxu0 %v127
    %448 = vmatprep.subr.mxu0 0.0
    %449 = vmatpush1.msra.mxu0 %v128
    %450 = vmatprep.subr.mxu0 0.0
    %451 = vmatpush1.msra.mxu0 %v129
    %452 = vmatprep.subr.mxu0 0.0
    %453 = vmatpush1.msra.mxu0 %v130
    %454 = vmatprep.subr.mxu0 0.0
    %455 = vmatpush1.msra.mxu0 %v131
    %456 = vmatprep.subr.mxu0 0.0
    %457 = vmatpush1.msra.mxu0 %v132
    %458 = vmatprep.mubr.f32.mxu0 %v393
    %459 = vmatmul.mubr.f32.gmra.mrb[0].mxu0 %v392
    %v460 = vpop.f32.mrb[0].mxu0
    %v461 = vadd.f32 %v137, %v460
    %v462 = vpop.f32.mrb[0].mxu0
    %463 = vdwg.mxu0
    %464 = vst [vmem:[#allocation5] sm:$0xff] %v461
    // Predicated region
    $region18: #{tpu_custom_call.1} parent=1 // pred_check
      _
    $region19: #{tpu_custom_call.1} parent=1 // pred_check_branch
      %466 = sbr.rel (0) target = $region21
    $region20: #{tpu_custom_call.1} parent=1 // pred_region
      %s468 = ssub.s32 128, 128
      %469 = vsyncadd [#allocation4], %s468
      %s471 = sshll.u32 [#allocation5], 4
      %s472 = int_to_ptr.vmem [resolvable:$true] %s471
      %474 = dma.vmem_to_hbm [thread:$0]  %s472, 128, %s3, [#allocation4]
    $region21: #{tpu_custom_call.1} parent=1 // pred_fallthru
      _
    // Predicated region
    $region22: #{tpu_custom_call.1} parent=1 // pred_check
      _
    $region23: #{tpu_custom_call.1} parent=1 // pred_check_branch
      %476 = sbr.rel (0) target = $region25
    $region24: #{tpu_custom_call.1} parent=1 // pred_region
      %477 = dma.done [#allocation4], 128
    $region25: #{tpu_custom_call.1} parent=1 // pred_fallthru
      _
    %478 = vsyncpa [#allocation3], 1
    %479 = vsyncpa [#allocation4], 1

</llo_original>
